<compile_context>
chip_gen: v5e
topology: v5e:2x2
jax: 0.10.0
libtpu: 0.0.40
codegen_flags: <defaults>
</compile_context>

<pallas_src>
import jax
import jax.numpy as jnp
from jax.experimental import pallas as pl
from jax.experimental.pallas import tpu as pltpu

D_IN, D_HID, D_OUT = 3, 3, 5  # Linear(3,3) then Linear(3,5)


def fused_mlp_kernel(x_ref, p_ref, o_ref):
    # x_ref: (R, D_IN)
    # p_ref: (4, D_HID + D_OUT) packed parameters:
    #   p[:3, :3]  = W1^T (3,3)    p[3:4, :3]  = b1 (1,3)
    #   p[:3, 3:]  = W2^T (3,5)    p[3:4, 3:]  = b2 (1,5)
    # o_ref: (R, D_OUT)
    x = x_ref[...]
    p = p_ref[...]                       # single tiny vector load; slices below are in-register
    w1t = p[:D_IN, :D_HID]               # (3, 3)
    b1 = p[D_IN:D_IN + 1, :D_HID]        # (1, 3)
    w2t = p[:D_HID, D_HID:]              # (3, 5)
    b2 = p[D_HID:D_HID + 1, D_HID:]      # (1, 5)

    h = jnp.dot(x, w1t, preferred_element_type=jnp.float32) + b1     # (R, 3)
    y = jnp.dot(h, w2t, preferred_element_type=jnp.float32) + b2     # (R, 5)
    o_ref[...] = y.astype(o_ref.dtype)


def pack_params(w1, b1, w2, b2):
    """One-time, init-side packing of both layers into a single (4, 8) array.

    Keeping this out of the per-call jitted forward removes every wrapper HLO
    op from the critical path of the pallas_call.
    """
    p1 = jnp.concatenate([w1.T, b1.reshape(1, D_HID)], axis=0)   # (4, 3)
    p2 = jnp.concatenate([w2.T, b2.reshape(1, D_OUT)], axis=0)   # (4, 5)
    return jnp.concatenate([p1, p2], axis=1)                     # (4, 8)


def model_forward(x0, packed_params):
    B, S, _ = x0.shape
    R = B * S
    x_rows = x0.reshape(R, D_IN)  # degenerate reshape, no data movement

    out_rows = pl.pallas_call(
        fused_mlp_kernel,
        out_shape=jax.ShapeDtypeStruct((R, D_OUT), x0.dtype),
        in_specs=[
            pl.BlockSpec(memory_space=pltpu.MemorySpace.VMEM),
            pl.BlockSpec(memory_space=pltpu.MemorySpace.VMEM),
        ],
        out_specs=pl.BlockSpec(memory_space=pltpu.MemorySpace.VMEM),
    )(x_rows, packed_params)

    return out_rows.reshape(B, S, D_OUT)


def init_linear_params(key, out_features, in_features):
    # Deterministic init mimicking torch.nn.Linear's U(-1/sqrt(fan_in), 1/sqrt(fan_in)).
    kw, kb = jax.random.split(key)
    bound = 1.0 / (in_features ** 0.5)
    w = jax.random.uniform(kw, (out_features, in_features), jnp.float32, -bound, bound)
    b = jax.random.uniform(kb, (out_features,), jnp.float32, -bound, bound)
    return w, b


if __name__ == "__main__":
    key = jax.random.PRNGKey(0)
    kx, k1, k2 = jax.random.split(key, 3)

    # Input consistent with the module: x0 = torch.randn(1, 15, 3)
    x0 = jax.random.normal(kx, (1, 15, 3), jnp.float32)

    # linear1: Linear(3, 3)
    w1, b1 = init_linear_params(k1, 3, 3)
    # TODO(synk): the PyTorch forward() constructs a fresh nn.Linear(3, 5) with new
    # random weights on every call; here linear2 is frozen once at init (synthetic
    # weights) — acknowledged semantic divergence.
    w2, b2 = init_linear_params(k2, 5, 3)

    packed = jax.block_until_ready(pack_params(w1, b1, w2, b2))  # one-time packing

    fwd = jax.jit(model_forward)
    out = fwd(x0, packed)
    jax.block_until_ready(out)

    # Reference check in plain JAX (unfolded, sequential formulation — same order
    # of operations the kernel performs).
    ref = (x0 @ w1.T + b1) @ w2.T + b2
    assert out.shape == (1, 15, 5), out.shape
    assert jnp.allclose(out, ref, atol=1e-5, rtol=1e-5), float(jnp.max(jnp.abs(out - ref)))

    print("KERNEL_OK")
</pallas_src>

<mosaic_0001>
module attributes {stable_mosaic.version = 11 : i64} {
  func.func @fused_mlp_kernel(%arg0: memref<15x3xf32, #tpu.memory_space<vmem>>, %arg1: memref<4x8xf32, #tpu.memory_space<vmem>>, %arg2: memref<15x5xf32, #tpu.memory_space<vmem>>) attributes {dimension_semantics = [], scalar_prefetch = 0 : i64, scratch_operands = 0 : i64, tpu.core_type = #tpu.core_type<tc>} {
    %c0 = arith.constant 0 : index
    %c0_0 = arith.constant 0 : index
    %0 = vector.load %arg0[%c0, %c0_0] : memref<15x3xf32, #tpu.memory_space<vmem>>, vector<15x3xf32>
    %c0_1 = arith.constant 0 : index
    %c0_2 = arith.constant 0 : index
    %1 = vector.load %arg1[%c0_1, %c0_2] : memref<4x8xf32, #tpu.memory_space<vmem>>, vector<4x8xf32>
    %2 = vector.extract_strided_slice %1 {offsets = [0, 0], sizes = [3, 3], strides = [1, 1]} : vector<4x8xf32> to vector<3x3xf32>
    %3 = vector.extract_strided_slice %1 {offsets = [3, 0], sizes = [1, 3], strides = [1, 1]} : vector<4x8xf32> to vector<1x3xf32>
    %4 = vector.extract_strided_slice %1 {offsets = [0, 3], sizes = [3, 5], strides = [1, 1]} : vector<4x8xf32> to vector<3x5xf32>
    %5 = vector.extract_strided_slice %1 {offsets = [3, 3], sizes = [1, 5], strides = [1, 1]} : vector<4x8xf32> to vector<1x5xf32>
    %cst = arith.constant dense<0.000000e+00> : vector<15x3xf32>
    %6 = tpu.matmul %0, %2, %cst {dimension_numbers = #tpu.dot_dimension_numbers<[1], [0], [0], [1], [0, 0, 1, 1], [], []>} : vector<15x3xf32>, vector<3x3xf32>, vector<15x3xf32> -> vector<15x3xf32>
    %7 = vector.broadcast %3 : vector<1x3xf32> to vector<15x3xf32>
    %8 = arith.addf %6, %7 : vector<15x3xf32>
    %cst_3 = arith.constant dense<0.000000e+00> : vector<15x5xf32>
    %9 = tpu.matmul %8, %4, %cst_3 {dimension_numbers = #tpu.dot_dimension_numbers<[1], [0], [0], [1], [0, 0, 1, 1], [], []>} : vector<15x3xf32>, vector<3x5xf32>, vector<15x5xf32> -> vector<15x5xf32>
    %10 = vector.broadcast %5 : vector<1x5xf32> to vector<15x5xf32>
    %11 = arith.addf %9, %10 : vector<15x5xf32>
    %c0_4 = arith.constant 0 : index
    %c0_5 = arith.constant 0 : index
    %12 = vector.load %arg2[%c0_4, %c0_5] : memref<15x5xf32, #tpu.memory_space<vmem>>, vector<15x5xf32>
    tpu.vector_store %arg2[%c0_4, %c0_5], %11 {strides = array<i32>} : memref<15x5xf32, #tpu.memory_space<vmem>>, vector<15x5xf32>,
    return
  }
}

</mosaic_0001>

<llo_original>
// kernel: model_forward.1
$region0: #{model_forward.1}
  #allocation0 [shape = 'u32[]', space=smem, size = 0x4, offset = 0x4, fixed_abs, tag = 'smem constant byte address 0x4 - core index']
  #allocation1 [shape = 'u32[72,128]{1,0:T(1,128)}', space=vmem, size = 0x9000, scoped, tag = 'internal scratch']
  %s0 = inlined_call_operand.vmem [shape: f32[15,3], index: 0, kind: input, shape index: {}]
  %s1 = inlined_call_operand.vmem [shape: f32[4,8], index: 1, kind: input, shape index: {}]
  %s2 = inlined_call_operand.vmem [shape: f32[15,5], index: 2, kind: output, shape index: {}]
  %s3 = sld [smem:[#allocation0]]
  $region18: #{model_forward.1} parent=0
    _
  %s5 = ssub.s32 1, %s3
  %s6 = scalar_select 0, %s5, %s3
  // Predicated region
  $region2: #{model_forward.1} parent=0 // pred_check
    _
  $region3: #{model_forward.1} parent=0 // pred_check_branch
    %8 = sbr.rel (0) target = $region5
  $region4: #{model_forward.1} parent=0 // pred_region
    _
  $region5: #{model_forward.1} parent=0 // pred_fallthru
    _
  // Predicated region
  $region6: #{model_forward.1} parent=0 // pred_check
    _
  $region7: #{model_forward.1} parent=0 // pred_check_branch
    %10 = sbr.rel (0) target = $region9
  $region8: #{model_forward.1} parent=0 // pred_region
    _
  $region9: #{model_forward.1} parent=0 // pred_fallthru
    _
  %v11 = vld [vmem:[%s0] sm:$0xff]
  %v12 = vld [vmem:[%s0 + $0x8] sm:$0x7f]
  %v13 = vld [vmem:[%s1] sm:$0xf]
  %v14 = vperm.slane %v13, 3
  %vm15 = vcmask 23552
  %v17 = vsel %vm15, %v11, 0
  %v20 = vsel %vm15, %v12, 0
  %vm22 = vcmask 1042432
  %v24 = vsel %vm22, %v13, 0
  %26 = vmatpush.msra.mxu0 0.0
  %27 = vmatpush.msra.mxu0 0.0
  %28 = vmatpush.msra.mxu0 0.0
  %29 = vmatpush.msra.mxu0 0.0
  %30 = vmatpush.msra.mxu0 0.0
  %31 = vmatpush.msra.mxu0 0.0
  %32 = vmatpush.msra.mxu0 0.0
  %33 = vmatpush.msra.mxu0 0.0
  %34 = vmatpush.msra.mxu0 0.0
  %35 = vmatpush.msra.mxu0 0.0
  %36 = vmatpush.msra.mxu0 0.0
  %37 = vmatpush.msra.mxu0 0.0
  %38 = vmatpush.msra.mxu0 0.0
  %39 = vmatpush.msra.mxu0 0.0
  %40 = vmatpush.msra.mxu0 0.0
  %41 = vmatpush.msra.mxu0 %v24
  %42 = vmatmul.f32.gmra.mxu0 %v17
  %v43 = vpop.f32.mrf.mxu0
  %v44 = vadd.f32 %v14, %v43
  %45 = vmatmul.f32.gmra.mxu0 %v20
  %v46 = vpop.f32.mrf.mxu0
  %v47 = vadd.f32 %v14, %v46
  %48 = vdwg.mxu0
  %49 = vrot.lane.b32.xlu0 %v13, 125
  %v50 = vpop.permute.xlu0 %49
  %52 = vrot.lane.b32.xlu0 %v14, 125
  %v53 = vpop.permute.xlu0 %52
  %v56 = vsel %vm15, %v44, 0
  %v59 = vsel %vm15, %v47, 0
  %v61 = vsel %vm22, %v50, 0
  %63 = vmatpush.msra.mxu0 0.0
  %64 = vmatpush.msra.mxu0 0.0
  %65 = vmatpush.msra.mxu0 0.0
  %66 = vmatpush.msra.mxu0 0.0
  %67 = vmatpush.msra.mxu0 0.0
  %68 = vmatpush.msra.mxu0 0.0
  %69 = vmatpush.msra.mxu0 0.0
  %70 = vmatpush.msra.mxu0 0.0
  %71 = vmatpush.msra.mxu0 0.0
  %72 = vmatpush.msra.mxu0 0.0
  %73 = vmatpush.msra.mxu0 0.0
  %74 = vmatpush.msra.mxu0 0.0
  %75 = vmatpush.msra.mxu0 0.0
  %76 = vmatpush.msra.mxu0 0.0
  %77 = vmatpush.msra.mxu0 0.0
  %78 = vmatpush.msra.mxu0 %v61
  %79 = vmatmul.f32.gmra.mxu0 %v56
  %v80 = vpop.f32.mrf.mxu0
  %v81 = vadd.f32 %v53, %v80
  %82 = vmatmul.f32.gmra.mxu0 %v59
  %v83 = vpop.f32.mrf.mxu0
  %v84 = vadd.f32 %v53, %v83
  %85 = vdwg.mxu0
  %vm86 = vcmask 39936
  %87 = vst.msk [vmem:[%s2] sm:$0xff] %vm86, %v81
  %vm88 = vcmask 38912
  %89 = vst.msk [vmem:[%s2 + $0x8] sm:$0x7f] %vm88, %v84
  // Predicated region
  $region10: #{model_forward.1} parent=0 // pred_check
    _
  $region11: #{model_forward.1} parent=0 // pred_check_branch
    %91 = sbr.rel (0) target = $region13
  $region12: #{model_forward.1} parent=0 // pred_region
    _
  $region13: #{model_forward.1} parent=0 // pred_fallthru
    _
  // Predicated region
  $region14: #{model_forward.1} parent=0 // pred_check
    _
  $region15: #{model_forward.1} parent=0 // pred_check_branch
    %93 = sbr.rel (0) target = $region17
  $region16: #{model_forward.1} parent=0 // pred_region
    _
  $region17: #{model_forward.1} parent=0 // pred_fallthru
    _

</llo_original>
